<compile_context>
chip_gen: v7x
topology: tpu7x:2x2x1
jax: 0.10.0
libtpu: 0.0.40
codegen_flags: <defaults>
</compile_context>

<pallas_src>
import jax
import jax.numpy as jnp
from jax.experimental import pallas as pl
from jax.experimental.pallas import tpu as pltpu

LANES = 128
TILE_BYTES = 2 << 20          # ~2 MiB per block buffer (v5e-safe without vmem flags)
SMALL_ELEMS = 256 * 1024      # < 1 MiB of f32 -> skip Pallas, let XLA fuse the affine


def _affine_kernel(w_ref, b_ref, x_ref, o_ref):
    # y = x * w + b  (the Linear(1,1) hot path): one f32 FMA per element on the VPU.
    o_ref[...] = x_ref[...] * w_ref[0] + b_ref[0]


def _choose_width(n_main):
    """Widest lane-dense width (multiple of 128) dividing the main element count."""
    for width in (1024, 512, 256, 128):
        if n_main % width == 0:
            return width
    return LANES  # unreachable: n_main is always a multiple of 128


def _choose_tr(rows, width):
    """Row-tile: ~TILE_BYTES per block, multiple of 8, prefer a divisor of rows."""
    target = max(8, (TILE_BYTES // (width * 4)) & ~7)
    if rows <= target:
        return rows  # single full-extent block (exempt from the (8,128) rule)
    lo = max(8, (target // 2) & ~7)
    for cand in range(target, lo - 1, -8):
        if rows % cand == 0:
            return cand  # last tile is full -> no masked stores, no short tail
    return target        # ragged last tile; Pallas masks the final write


def _grid_semantics(num_steps):
    """CORE_PARALLEL on v7x (2 TCs) with >=2 steps; plain 'parallel' elsewhere."""
    try:
        kind = jax.devices()[0].device_kind.lower()
    except Exception:  # pragma: no cover - be conservative if device query fails
        kind = ""
    core_par = getattr(pltpu, "CORE_PARALLEL", None)
    if num_steps >= 2 and core_par is not None and ("v7" in kind or "7x" in kind):
        return (core_par,)
    return ("parallel",)


def net_forward(x, weight, bias, *, min_kernel_elems=SMALL_ELEMS):
    """Replicates Net.forward: reshape(-1, 1) then Linear(1, 1).

    x:      any-shaped float32 array
    weight: scalar float32 (the (1,1) Linear weight)
    bias:   scalar float32 (the (1,) Linear bias)
    returns: (N, 1) float32, N = x.size
    """
    x = jnp.asarray(x, jnp.float32)
    w = jnp.asarray(weight, jnp.float32).reshape(())
    b = jnp.asarray(bias, jnp.float32).reshape(())
    n = x.size
    flat = x.reshape(-1)

    # Small-input fast path: pallas_call launch overhead would dominate.
    if n < max(int(min_kernel_elems), LANES):
        return (flat * w + b).reshape(n, 1)

    # Kernel handles the leading multiple-of-128 chunk; the (<128-elem) ragged tail,
    # if any, is computed with plain XLA and concatenated (no pad / slice passes).
    n_main = (n // LANES) * LANES
    head = flat if n_main == n else flat[:n_main]

    width = _choose_width(n_main)
    rows = n_main // width
    slab = head.reshape(rows, width)          # reshape of contiguous data: free

    tr = _choose_tr(rows, width)
    num_steps = pl.cdiv(rows, tr)
    grid = (num_steps,)

    out_slab = pl.pallas_call(
        _affine_kernel,
        out_shape=jax.ShapeDtypeStruct((rows, width), jnp.float32),
        grid=grid,
        in_specs=[
            pl.BlockSpec(memory_space=pltpu.SMEM),          # weight scalar
            pl.BlockSpec(memory_space=pltpu.SMEM),          # bias scalar
            pl.BlockSpec((tr, width), lambda i: (i, 0)),    # x row tiles
        ],
        out_specs=pl.BlockSpec((tr, width), lambda i: (i, 0)),
        compiler_params=pltpu.CompilerParams(
            dimension_semantics=_grid_semantics(num_steps)),
        cost_estimate=pl.CostEstimate(
            flops=2 * n_main, transcendentals=0, bytes_accessed=8 * n_main),
    )(w.reshape(1), b.reshape(1), slab)

    out_main = out_slab.reshape(n_main)
    if n_main == n:
        return out_main.reshape(n, 1)
    tail = flat[n_main:] * w + b              # < 128 elements, plain XLA
    return jnp.concatenate([out_main, tail]).reshape(n, 1)


if __name__ == "__main__":
    key = jax.random.PRNGKey(0)
    k_x, k_w, k_b = jax.random.split(key, 3)

    # Small input consistent with the forward (any shape works; it gets flattened).
    x = jax.random.normal(k_x, (2, 4, 16, 16), dtype=jnp.float32)

    # Deterministic Linear(1,1) parameters (PyTorch init: U(-1, 1) for in_features=1).
    weight = jax.random.uniform(k_w, (), minval=-1.0, maxval=1.0, dtype=jnp.float32)
    bias = jax.random.uniform(k_b, (), minval=-1.0, maxval=1.0, dtype=jnp.float32)

    # Force the Pallas path even at this small demo size so the kernel is exercised.
    fwd_kernel = jax.jit(lambda xx, ww, bb: net_forward(xx, ww, bb, min_kernel_elems=0))
    y = jax.block_until_ready(fwd_kernel(x, weight, bias))
    ref = x.reshape(-1, 1) * weight + bias
    assert y.shape == (x.size, 1), y.shape
    assert jnp.allclose(y, ref, atol=1e-6, rtol=1e-6)

    # Ragged element count: kernel head (multiple of 128) + plain-XLA tail.
    x2 = jax.random.normal(k_x, (2048 + 37,), dtype=jnp.float32)
    y2 = jax.block_until_ready(fwd_kernel(x2, weight, bias))
    ref2 = x2.reshape(-1, 1) * weight + bias
    assert y2.shape == (x2.size, 1), y2.shape
    assert jnp.allclose(y2, ref2, atol=1e-6, rtol=1e-6)

    # Default threshold: tiny inputs bypass pallas_call entirely (pure-XLA fast path).
    y3 = jax.block_until_ready(jax.jit(net_forward)(x, weight, bias))
    assert jnp.allclose(y3, ref, atol=1e-6, rtol=1e-6)

    print("KERNEL_OK")
</pallas_src>

<mosaic_0001>
module attributes {stable_mosaic.version = 11 : i64} {
  func.func @_affine_kernel(%arg0: i32, %arg1: memref<1xf32, #tpu.memory_space<smem>>, %arg2: memref<1xf32, #tpu.memory_space<smem>>, %arg3: memref<2x1024xf32, #tpu.memory_space<vmem>>, %arg4: memref<2x1024xf32, #tpu.memory_space<vmem>>) attributes {dimension_semantics = [#tpu.dimension_semantics<parallel>], iteration_bounds = array<i64: 1>, scalar_prefetch = 0 : i64, scratch_operands = 0 : i64, tpu.core_type = #tpu.core_type<tc>, window_params = [{transform_indices = @transform_0, window_bounds = array<i64: 1>}, {transform_indices = @transform_1, window_bounds = array<i64: 1>}, {transform_indices = @transform_2, window_bounds = array<i64: 2, 1024>}, {transform_indices = @transform_3, window_bounds = array<i64: 2, 1024>}]} {
    %c0 = arith.constant 0 : index
    %c0_0 = arith.constant 0 : index
    %0 = vector.load %arg3[%c0, %c0_0] : memref<2x1024xf32, #tpu.memory_space<vmem>>, vector<2x1024xf32>
    %c0_1 = arith.constant 0 : index
    %1 = memref.load %arg1[%c0_1] : memref<1xf32, #tpu.memory_space<smem>>
    %2 = vector.broadcast %1 : f32 to vector<2x1024xf32>
    %3 = arith.mulf %0, %2 : vector<2x1024xf32>
    %c0_2 = arith.constant 0 : index
    %4 = memref.load %arg2[%c0_2] : memref<1xf32, #tpu.memory_space<smem>>
    %5 = vector.broadcast %4 : f32 to vector<2x1024xf32>
    %6 = arith.addf %3, %5 : vector<2x1024xf32>
    %c0_3 = arith.constant 0 : index
    %c0_4 = arith.constant 0 : index
    %7 = vector.load %arg4[%c0_3, %c0_4] : memref<2x1024xf32, #tpu.memory_space<vmem>>, vector<2x1024xf32>
    tpu.vector_store %arg4[%c0_3, %c0_4], %6 {strides = array<i32>} : memref<2x1024xf32, #tpu.memory_space<vmem>>, vector<2x1024xf32>,
    return
  }
  func.func @transform_0(%arg0: i32) -> i32 {
    %c0_i32 = arith.constant 0 : i32
    %c0_i32_0 = arith.constant 0 : i32
    return %c0_i32 : i32
  }
  func.func @transform_1(%arg0: i32) -> i32 {
    %c0_i32 = arith.constant 0 : i32
    %c0_i32_0 = arith.constant 0 : i32
    return %c0_i32 : i32
  }
  func.func @transform_2(%arg0: i32) -> (i32, i32) {
    %c0_i32 = arith.constant 0 : i32
    %c0_i32_0 = arith.constant 0 : i32
    return %arg0, %c0_i32 : i32, i32
  }
  func.func @transform_3(%arg0: i32) -> (i32, i32) {
    %c0_i32 = arith.constant 0 : i32
    %c0_i32_0 = arith.constant 0 : i32
    return %arg0, %c0_i32 : i32, i32
  }
}

</mosaic_0001>

<llo_original>
// kernel: _lambda_.1
$region0: #{_lambda_.1}
  #allocation0 [shape = 'u32[]', space=smem, size = 0x4, offset = 0x4, fixed_abs, tag = 'smem constant byte address 0x4 - core index']
  #allocation1 [shape = 'u32[144,128]{1,0:T(1,128)}', space=vmem, size = 0x12000, scoped, tag = 'internal scratch']
  #allocation2 [shape = 'f32[1]{0:T(128)S(6)}', space=smem, size = 0x200, scoped, tag = 'scoped memory for _lambda_.1']
  #allocation3 [shape = 'f32[1]{0:T(128)S(6)}', space=smem, size = 0x200, scoped, tag = 'scoped memory for _lambda_.1']
  %s0 = inlined_call_operand.<no memory space> [shape: f32[1], index: 0, kind: input, shape index: {}]
  %s1 = inlined_call_operand.<no memory space> [shape: f32[1], index: 1, kind: input, shape index: {}]
  %s2 = inlined_call_operand.vmem [shape: f32[2,1024], index: 2, kind: input, shape index: {}]
  %s3 = inlined_call_operand.vmem [shape: f32[2,1024], index: 3, kind: output, shape index: {}]
  %s4 = sld [smem:[#allocation0]]
  $region22: #{_lambda_.1} parent=0
    _
  %s6 = ssub.s32 1, %s4
  %s7 = scalar_select 0, %s6, %s4
  %8 = sst [smem:[#allocation2]] %s0
  %9 = sst [smem:[#allocation3]] %s1
  // Predicated region
  $region2: #{_lambda_.1} parent=0 // pred_check
    _
  $region3: #{_lambda_.1} parent=0 // pred_check_branch
    %11 = sbr.rel (0) target = $region5
  $region4: #{_lambda_.1} parent=0 // pred_region
    _
  $region5: #{_lambda_.1} parent=0 // pred_fallthru
    _
  // Predicated region
  $region6: #{_lambda_.1} parent=0 // pred_check
    _
  $region7: #{_lambda_.1} parent=0 // pred_check_branch
    %13 = sbr.rel (0) target = $region9
  $region8: #{_lambda_.1} parent=0 // pred_region
    _
  $region9: #{_lambda_.1} parent=0 // pred_fallthru
    _
  // Predicated region
  $region10: #{_lambda_.1} parent=0 // pred_check
    _
  $region11: #{_lambda_.1} parent=0 // pred_check_branch
    %15 = sbr.rel (0) target = $region13
  $region12: #{_lambda_.1} parent=0 // pred_region
    _
  $region13: #{_lambda_.1} parent=0 // pred_fallthru
    _
  %v16 = vld [vmem:[%s2] sm:$0xff]
  %v17 = vld [vmem:[%s2 + $0x8] sm:$0xff]
  %s18 = sld [smem:[#allocation2]]
  %v19 = vstv %s18
  %v20 = vmul.f32 %v16, %v19
  %v21 = vmul.f32 %v17, %v19
  %s22 = sld [smem:[#allocation3]]
  %v23 = vstv %s22
  %v24 = vadd.f32 %v20, %v23
  %v25 = vadd.f32 %v21, %v23
  %26 = vst [vmem:[%s3] sm:$0xff] %v24
  %27 = vst [vmem:[%s3 + $0x8] sm:$0xff] %v25
  // Predicated region
  $region14: #{_lambda_.1} parent=0 // pred_check
    _
  $region15: #{_lambda_.1} parent=0 // pred_check_branch
    %29 = sbr.rel (0) target = $region17
  $region16: #{_lambda_.1} parent=0 // pred_region
    _
  $region17: #{_lambda_.1} parent=0 // pred_fallthru
    _
  // Predicated region
  $region18: #{_lambda_.1} parent=0 // pred_check
    _
  $region19: #{_lambda_.1} parent=0 // pred_check_branch
    %31 = sbr.rel (0) target = $region21
  $region20: #{_lambda_.1} parent=0 // pred_region
    _
  $region21: #{_lambda_.1} parent=0 // pred_fallthru
    _

</llo_original>
